<compile_context>
chip_gen: v7x
topology: tpu7x:2x2x1
jax: 0.10.0
libtpu: 0.0.40
codegen_flags: <defaults>
</compile_context>

<pallas_src>
import math

import jax
import jax.numpy as jnp
from jax.experimental import pallas as pl
from jax.experimental.pallas import tpu as pltpu


def _round_up(n, m):
    return -(-n // m) * m


def make_mlp_kernel(num_linear_layers, use_bf16):
    """Fused MLP kernel.

    refs = (x_ref, w0_ref, b0_ref, w1_ref, b1_ref, ..., out_ref)

    Normalization ((x - mean)/std) and the concat with state_para are pre-folded
    into layer 0's weight/bias on the host, so the kernel is a straight chain of
    dot -> bias -> tanh.
    """

    def kernel(*refs):
        x_ref, out_ref = refs[0], refs[-1]
        h = x_ref[...]
        if use_bf16:
            h = h.astype(jnp.bfloat16)
        for i in range(num_linear_layers):
            w = refs[1 + 2 * i][...]
            b = refs[2 + 2 * i][...]
            # MXU matmul with f32 accumulation; bias add stays f32 on the VPU.
            h = jnp.dot(h, w, preferred_element_type=jnp.float32) + b
            if i < num_linear_layers - 1:
                if use_bf16:
                    # bf16 tanh feeds the next bf16 matmul directly (EUP bf16 path
                    # on v6e/v7x; Mosaic upcasts transparently on v5e).
                    h = jnp.tanh(h.astype(jnp.bfloat16))
                else:
                    h = jnp.tanh(h)
        out_ref[...] = h.astype(out_ref.dtype)

    return kernel


class NetPallas:
    """JAX/Pallas port of the PyTorch `Net` module (single-dispatch fused MLP)."""

    LANE = 128              # hidden layers padded to lane width (exact, free)
    MAX_BATCH_BLOCK = 2048  # rows per grid step upper bound (multiple of 8)

    def __init__(self, layers, X, key, use_bf16=True):
        # torch: X.mean(0, keepdim=True), X.std(0, keepdim=True) (unbiased std).
        # NOTE: like the PyTorch original, a constant feature column (std == 0)
        # yields inf/nan — semantics intentionally preserved.
        self.X_mean = jnp.mean(X, axis=0, keepdims=True)
        self.X_std = jnp.std(X, axis=0, ddof=1, keepdims=True)
        self.layers = list(layers)
        self.num_layers = len(layers)
        self.d_x = X.shape[1]
        self.d_p = layers[0] - self.d_x
        assert self.d_p >= 0, "layers[0] must be >= X feature dim"
        self.use_bf16 = use_bf16

        # nn.Linear-style init: U(-k, k), k = 1/sqrt(fan_in).
        # Weights stored as [in_features, out_features] (transpose of torch).
        self.params = []
        for i in range(len(layers) - 1):
            fan_in, fan_out = layers[i], layers[i + 1]
            key, kw, kb = jax.random.split(key, 3)
            bound = 1.0 / math.sqrt(fan_in)
            w = jax.random.uniform(
                kw, (fan_in, fan_out), jnp.float32, minval=-bound, maxval=bound
            )
            b = jax.random.uniform(
                kb, (1, fan_out), jnp.float32, minval=-bound, maxval=bound
            )
            self.params.append((w, b))

        self._build_kernel_params()

    def _build_kernel_params(self):
        """Fold (x - mean)/std + concat into layer 0, fuse its two matmuls into one
        weight, pad HIDDEN widths to 128 lanes (exact), keep the FINAL width
        un-padded, and optionally cast weights to bf16 (biases stay f32)."""
        n_linear = self.num_layers - 1
        widths = list(self.layers[1:])
        padded = [_round_up(w, self.LANE) for w in widths[:-1]] + [widths[-1]]
        self.padded_widths = padded

        w0, b0 = self.params[0]
        w0_x, w0_p = w0[: self.d_x], w0[self.d_x:]
        inv_std = 1.0 / self.X_std                      # [1, d_x]
        # ((x - mean)/std) @ w0_x == x @ (w0_x * (1/std)^T) - (mean/std) @ w0_x
        w0x_f = w0_x * inv_std.T                        # [d_x, n1]
        b0_f = b0 - (self.X_mean * inv_std) @ w0_x      # [1, n1]
        w0_f = jnp.concatenate([w0x_f, w0_p], axis=0)   # [d_x + d_p, n1] (fused)

        wdt = jnp.bfloat16 if self.use_bf16 else jnp.float32

        def pad_cols(a, n):
            return jnp.pad(a, ((0, 0), (0, n - a.shape[1])))

        def pad_rows(a, m):
            return jnp.pad(a, ((0, m - a.shape[0]), (0, 0)))

        kp = [
            pad_cols(w0_f, padded[0]).astype(wdt),
            pad_cols(b0_f, padded[0]),                  # biases stay f32
        ]
        for i in range(1, n_linear):
            w, b = self.params[i]
            kp.append(pad_cols(pad_rows(w, padded[i - 1]), padded[i]).astype(wdt))
            kp.append(pad_cols(b, padded[i]))
        self.kernel_params = kp

    def __call__(self, x, state_para):
        n_linear = self.num_layers - 1
        batch = x.shape[0]
        out_dim = self.layers[-1]
        d_in = self.d_x + self.d_p

        # Concat once in the wrapper (tiny bytes); normalization is already folded
        # into layer-0's weight/bias.  Also naturally handles d_p == 0.
        xin = jnp.concatenate(
            [x.astype(jnp.float32), state_para.astype(jnp.float32)], axis=1
        )

        # Batch tiling: few/large tiles (per-step overhead ~0.35us), sized to
        # minimize padding waste; tile count rounded to a multiple of 2 when > 1
        # so v7x's two TensorCores split the "parallel" axis evenly.
        n_tiles = -(-batch // self.MAX_BATCH_BLOCK)
        if n_tiles > 1:
            n_tiles = _round_up(n_tiles, 2)
        bb = _round_up(-(-batch // n_tiles), 8)
        batch_p = _round_up(batch, bb)
        if batch_p != batch:
            xin = jnp.pad(xin, ((0, batch_p - batch), (0, 0)))
        grid = (batch_p // bb,)

        kernel = make_mlp_kernel(n_linear, self.use_bf16)

        # Input tiled over batch; params resident via constant index_maps.
        in_specs = [pl.BlockSpec((bb, d_in), lambda i: (i, 0))]
        in_specs += [pl.BlockSpec(a.shape, lambda i: (0, 0)) for a in self.kernel_params]

        # Advisory cost estimate (un-padded output, actual weight dtype).
        dims = [d_in] + list(self.padded_widths)
        flops = sum(2 * batch_p * dims[i] * dims[i + 1] for i in range(n_linear))
        transcendentals = batch_p * sum(self.padded_widths[:-1])
        wbytes = sum(int(a.size) * a.dtype.itemsize for a in self.kernel_params)
        bytes_accessed = 4 * batch_p * (d_in + out_dim) + wbytes

        out = pl.pallas_call(
            kernel,
            out_shape=jax.ShapeDtypeStruct((batch_p, out_dim), jnp.float32),
            grid=grid,
            in_specs=in_specs,
            out_specs=pl.BlockSpec((bb, out_dim), lambda i: (i, 0)),
            compiler_params=pltpu.CompilerParams(
                dimension_semantics=("parallel",),
            ),
            cost_estimate=pl.CostEstimate(
                flops=int(flops),
                transcendentals=int(transcendentals),
                bytes_accessed=int(bytes_accessed),
            ),
        )(xin, *self.kernel_params)

        return out[:batch]


def reference_forward(net, x, state_para):
    """Pure-JAX f32 reference mirroring the PyTorch forward (unfolded params)."""
    h = (x - net.X_mean) / net.X_std
    h = jnp.concatenate([h, state_para], axis=1)
    n_linear = net.num_layers - 1
    for i, (w, b) in enumerate(net.params):
        h = h @ w + b
        if i < n_linear - 1:
            h = jnp.tanh(h)
    return h


if __name__ == "__main__":
    key = jax.random.PRNGKey(0)
    k_x, k_sp, k_X, k_params = jax.random.split(key, 4)

    # Small, forward-consistent shapes:
    #   x          : [batch=8, d_x=4]
    #   state_para : [batch=8, d_p=4]
    #   layers[0]  : d_x + d_p = 8  (input to first Linear after concat)
    d_x, d_p, batch = 4, 4, 8
    layers = [d_x + d_p, 32, 32, 2]

    X_data = jax.random.normal(k_X, (16, d_x), jnp.float32) * 2.0 + 0.5
    x = jax.random.normal(k_x, (batch, d_x), jnp.float32)
    state_para = jax.random.normal(k_sp, (batch, d_p), jnp.float32)

    # f32 path: tight check vs the PyTorch-style reference.
    net_f32 = NetPallas(layers, X_data, k_params, use_bf16=False)
    out_f32 = net_f32(x, state_para)
    jax.block_until_ready(out_f32)
    ref = reference_forward(net_f32, x, state_para)
    assert out_f32.shape == (batch, layers[-1])
    assert jnp.allclose(out_f32, ref, atol=1e-4, rtol=1e-4), "f32 mismatch vs reference"

    # bf16-matmul path (default; the v6e/v7x MXU lever): looser tolerance vs f32 ref.
    net_bf16 = NetPallas(layers, X_data, k_params, use_bf16=True)
    out_bf16 = net_bf16(x, state_para)
    jax.block_until_ready(out_bf16)
    assert out_bf16.shape == (batch, layers[-1])
    assert jnp.allclose(out_bf16, ref, atol=3e-2, rtol=3e-2), "bf16 mismatch vs reference"

    print("KERNEL_OK")
</pallas_src>

<mosaic_0001>
module attributes {stable_mosaic.version = 11 : i64} {
  func.func @kernel(%arg0: i32, %arg1: memref<8x8xf32, #tpu.memory_space<vmem>>, %arg2: memref<8x128xf32, #tpu.memory_space<vmem>>, %arg3: memref<1x128xf32, #tpu.memory_space<vmem>>, %arg4: memref<128x128xf32, #tpu.memory_space<vmem>>, %arg5: memref<1x128xf32, #tpu.memory_space<vmem>>, %arg6: memref<128x2xf32, #tpu.memory_space<vmem>>, %arg7: memref<1x2xf32, #tpu.memory_space<vmem>>, %arg8: memref<8x2xf32, #tpu.memory_space<vmem>>) attributes {dimension_semantics = [#tpu.dimension_semantics<parallel>], iteration_bounds = array<i64: 1>, scalar_prefetch = 0 : i64, scratch_operands = 0 : i64, tpu.core_type = #tpu.core_type<tc>, window_params = [{transform_indices = @transform_0, window_bounds = array<i64: 8, 8>}, {pipeline_mode = #tpu.pipeline_mode<synchronous>, transform_indices = @transform_1, window_bounds = array<i64: 8, 128>}, {pipeline_mode = #tpu.pipeline_mode<synchronous>, transform_indices = @transform_2, window_bounds = array<i64: 1, 128>}, {pipeline_mode = #tpu.pipeline_mode<synchronous>, transform_indices = @transform_3, window_bounds = array<i64: 128, 128>}, {pipeline_mode = #tpu.pipeline_mode<synchronous>, transform_indices = @transform_4, window_bounds = array<i64: 1, 128>}, {pipeline_mode = #tpu.pipeline_mode<synchronous>, transform_indices = @transform_5, window_bounds = array<i64: 128, 2>}, {pipeline_mode = #tpu.pipeline_mode<synchronous>, transform_indices = @transform_6, window_bounds = array<i64: 1, 2>}, {transform_indices = @transform_7, window_bounds = array<i64: 8, 2>}]} {
    %c0 = arith.constant 0 : index
    %c0_0 = arith.constant 0 : index
    %0 = vector.load %arg1[%c0, %c0_0] : memref<8x8xf32, #tpu.memory_space<vmem>>, vector<8x8xf32>
    %c0_1 = arith.constant 0 : index
    %c0_2 = arith.constant 0 : index
    %1 = vector.load %arg2[%c0_1, %c0_2] : memref<8x128xf32, #tpu.memory_space<vmem>>, vector<8x128xf32>
    %c0_3 = arith.constant 0 : index
    %c0_4 = arith.constant 0 : index
    %2 = vector.load %arg3[%c0_3, %c0_4] : memref<1x128xf32, #tpu.memory_space<vmem>>, vector<1x128xf32>
    %cst = arith.constant dense<0.000000e+00> : vector<8x128xf32>
    %3 = tpu.matmul %0, %1, %cst {dimension_numbers = #tpu.dot_dimension_numbers<[1], [0], [0], [1], [0, 0, 1, 1], [], []>} : vector<8x8xf32>, vector<8x128xf32>, vector<8x128xf32> -> vector<8x128xf32>
    %4 = vector.broadcast %2 : vector<1x128xf32> to vector<8x128xf32>
    %5 = arith.addf %3, %4 : vector<8x128xf32>
    %6 = math.tanh %5 : vector<8x128xf32>
    %c0_5 = arith.constant 0 : index
    %c0_6 = arith.constant 0 : index
    %7 = vector.load %arg4[%c0_5, %c0_6] : memref<128x128xf32, #tpu.memory_space<vmem>>, vector<128x128xf32>
    %c0_7 = arith.constant 0 : index
    %c0_8 = arith.constant 0 : index
    %8 = vector.load %arg5[%c0_7, %c0_8] : memref<1x128xf32, #tpu.memory_space<vmem>>, vector<1x128xf32>
    %cst_9 = arith.constant dense<0.000000e+00> : vector<8x128xf32>
    %9 = tpu.matmul %6, %7, %cst_9 {dimension_numbers = #tpu.dot_dimension_numbers<[1], [0], [0], [1], [0, 0, 1, 1], [], []>} : vector<8x128xf32>, vector<128x128xf32>, vector<8x128xf32> -> vector<8x128xf32>
    %10 = vector.broadcast %8 : vector<1x128xf32> to vector<8x128xf32>
    %11 = arith.addf %9, %10 : vector<8x128xf32>
    %12 = math.tanh %11 : vector<8x128xf32>
    %c0_10 = arith.constant 0 : index
    %c0_11 = arith.constant 0 : index
    %13 = vector.load %arg6[%c0_10, %c0_11] : memref<128x2xf32, #tpu.memory_space<vmem>>, vector<128x2xf32>
    %c0_12 = arith.constant 0 : index
    %c0_13 = arith.constant 0 : index
    %14 = vector.load %arg7[%c0_12, %c0_13] : memref<1x2xf32, #tpu.memory_space<vmem>>, vector<1x2xf32>
    %cst_14 = arith.constant dense<0.000000e+00> : vector<8x2xf32>
    %15 = tpu.matmul %12, %13, %cst_14 {dimension_numbers = #tpu.dot_dimension_numbers<[1], [0], [0], [1], [0, 0, 1, 1], [], []>} : vector<8x128xf32>, vector<128x2xf32>, vector<8x2xf32> -> vector<8x2xf32>
    %16 = vector.broadcast %14 : vector<1x2xf32> to vector<8x2xf32>
    %17 = arith.addf %15, %16 : vector<8x2xf32>
    %c0_15 = arith.constant 0 : index
    %c0_16 = arith.constant 0 : index
    %18 = vector.load %arg8[%c0_15, %c0_16] : memref<8x2xf32, #tpu.memory_space<vmem>>, vector<8x2xf32>
    tpu.vector_store %arg8[%c0_15, %c0_16], %17 {strides = array<i32>} : memref<8x2xf32, #tpu.memory_space<vmem>>, vector<8x2xf32>,
    return
  }
  func.func @transform_0(%arg0: i32) -> (i32, i32) {
    %c0_i32 = arith.constant 0 : i32
    %c0_i32_0 = arith.constant 0 : i32
    return %arg0, %c0_i32 : i32, i32
  }
  func.func @transform_1(%arg0: i32) -> (i32, i32) {
    %c0_i32 = arith.constant 0 : i32
    %c0_i32_0 = arith.constant 0 : i32
    %c0_i32_1 = arith.constant 0 : i32
    return %c0_i32, %c0_i32_0 : i32, i32
  }
  func.func @transform_2(%arg0: i32) -> (i32, i32) {
    %c0_i32 = arith.constant 0 : i32
    %c0_i32_0 = arith.constant 0 : i32
    %c0_i32_1 = arith.constant 0 : i32
    return %c0_i32, %c0_i32_0 : i32, i32
  }
  func.func @transform_3(%arg0: i32) -> (i32, i32) {
    %c0_i32 = arith.constant 0 : i32
    %c0_i32_0 = arith.constant 0 : i32
    %c0_i32_1 = arith.constant 0 : i32
    return %c0_i32, %c0_i32_0 : i32, i32
  }
  func.func @transform_4(%arg0: i32) -> (i32, i32) {
    %c0_i32 = arith.constant 0 : i32
    %c0_i32_0 = arith.constant 0 : i32
    %c0_i32_1 = arith.constant 0 : i32
    return %c0_i32, %c0_i32_0 : i32, i32
  }
  func.func @transform_5(%arg0: i32) -> (i32, i32) {
    %c0_i32 = arith.constant 0 : i32
    %c0_i32_0 = arith.constant 0 : i32
    %c0_i32_1 = arith.constant 0 : i32
    return %c0_i32, %c0_i32_0 : i32, i32
  }
  func.func @transform_6(%arg0: i32) -> (i32, i32) {
    %c0_i32 = arith.constant 0 : i32
    %c0_i32_0 = arith.constant 0 : i32
    %c0_i32_1 = arith.constant 0 : i32
    return %c0_i32, %c0_i32_0 : i32, i32
  }
  func.func @transform_7(%arg0: i32) -> (i32, i32) {
    %c0_i32 = arith.constant 0 : i32
    %c0_i32_0 = arith.constant 0 : i32
    return %arg0, %c0_i32 : i32, i32
  }
}

</mosaic_0001>

<llo_original>
// kernel: tpu_custom_call.1
$region0: #{tpu_custom_call.1}
  #allocation0 [shape = 'u32[]', space=smem, size = 0x4, offset = 0x4, fixed_abs, tag = 'smem constant byte address 0x4 - core index']
  #allocation1 [shape = 'u32[144,128]{1,0:T(1,128)}', space=vmem, size = 0x12000, scoped, tag = 'internal scratch']
  %s0 = inlined_call_operand.vmem [shape: f32[8,8], index: 0, kind: input, shape index: {}]
  %s1 = inlined_call_operand.hbm [shape: f32[8,128], index: 1, kind: input, shape index: {}]
  %s2 = inlined_call_operand.vmem [shape: f32[1,128], index: 2, kind: input, shape index: {}]
  %s3 = inlined_call_operand.vmem [shape: f32[128,128], index: 3, kind: input, shape index: {}]
  %s4 = inlined_call_operand.vmem [shape: f32[1,128], index: 4, kind: input, shape index: {}]
  %s5 = inlined_call_operand.vmem [shape: f32[128,2], index: 5, kind: input, shape index: {}]
  %s6 = inlined_call_operand.vmem [shape: f32[1,2], index: 6, kind: input, shape index: {}]
  %s7 = inlined_call_operand.vmem [shape: f32[8,2], index: 7, kind: output, shape index: {}]
  %s8 = sld [smem:[#allocation0]]
  $region42: #{tpu_custom_call.1} parent=0
    _
  %s10 = ssub.s32 1, %s8
  %s11 = scalar_select 0, %s10, %s8
  $region1: #{tpu_custom_call.1} parent=0
    #allocation2 [shape = 'u8[4096]{0}', space=vmem, size = 0x1000, scoped, tag = 'input window, operand 1, single buffered']
    #allocation3 [shape = 's32[1]{0}', space=sflag, size = 0x4, scoped, tag = 'scoped memory for tpu_custom_call.1']
    %12 = vsyncpa [#allocation3], 0
    // Predicated region
    $region2: #{tpu_custom_call.1} parent=1 // pred_check
      _
    $region3: #{tpu_custom_call.1} parent=1 // pred_check_branch
      %14 = sbr.rel (0) target = $region5
    $region4: #{tpu_custom_call.1} parent=1 // pred_region
      _
    $region5: #{tpu_custom_call.1} parent=1 // pred_fallthru
      _
    // Predicated region
    $region6: #{tpu_custom_call.1} parent=1 // pred_check
      _
    $region7: #{tpu_custom_call.1} parent=1 // pred_check_branch
      %16 = sbr.rel (0) target = $region9
    $region8: #{tpu_custom_call.1} parent=1 // pred_region
      %s18 = ssub.s32 128, 128
      %19 = vsyncadd [#allocation3], %s18
      %s21 = sshll.u32 [#allocation2], 4
      %s22 = int_to_ptr.vmem [resolvable:$true] %s21
      %24 = dma.hbm_to_vmem [thread:$0]  %s1, 128, %s22, [#allocation3]
    $region9: #{tpu_custom_call.1} parent=1 // pred_fallthru
      _
    // Predicated region
    $region10: #{tpu_custom_call.1} parent=1 // pred_check
      _
    $region11: #{tpu_custom_call.1} parent=1 // pred_check_branch
      %26 = sbr.rel (0) target = $region13
    $region12: #{tpu_custom_call.1} parent=1 // pred_region
      _
    $region13: #{tpu_custom_call.1} parent=1 // pred_fallthru
      _
    // Predicated region
    $region14: #{tpu_custom_call.1} parent=1 // pred_check
      _
    $region15: #{tpu_custom_call.1} parent=1 // pred_check_branch
      %28 = sbr.rel (0) target = $region17
    $region16: #{tpu_custom_call.1} parent=1 // pred_region
      _
    $region17: #{tpu_custom_call.1} parent=1 // pred_fallthru
      _
    // Predicated region
    $region18: #{tpu_custom_call.1} parent=1 // pred_check
      _
    $region19: #{tpu_custom_call.1} parent=1 // pred_check_branch
      %30 = sbr.rel (0) target = $region21
    $region20: #{tpu_custom_call.1} parent=1 // pred_region
      _
    $region21: #{tpu_custom_call.1} parent=1 // pred_fallthru
      _
    // Predicated region
    $region22: #{tpu_custom_call.1} parent=1 // pred_check
      _
    $region23: #{tpu_custom_call.1} parent=1 // pred_check_branch
      %32 = sbr.rel (0) target = $region25
    $region24: #{tpu_custom_call.1} parent=1 // pred_region
      _
    $region25: #{tpu_custom_call.1} parent=1 // pred_fallthru
      _
    // Predicated region
    $region26: #{tpu_custom_call.1} parent=1 // pred_check
      _
    $region27: #{tpu_custom_call.1} parent=1 // pred_check_branch
      %34 = sbr.rel (0) target = $region29
    $region28: #{tpu_custom_call.1} parent=1 // pred_region
      _
    $region29: #{tpu_custom_call.1} parent=1 // pred_fallthru
      _
    // Predicated region
    $region30: #{tpu_custom_call.1} parent=1 // pred_check
      _
    $region31: #{tpu_custom_call.1} parent=1 // pred_check_branch
      %36 = sbr.rel (0) target = $region33
    $region32: #{tpu_custom_call.1} parent=1 // pred_region
      %37 = dma.done [#allocation3], 128
    $region33: #{tpu_custom_call.1} parent=1 // pred_fallthru
      _
    %v38 = vld [vmem:[%s0] sm:$0xff]
    %v39 = vld [vmem:[#allocation2] sm:$0xff]
    %v40 = vld [vmem:[%s2] sm:$0x1]
    %v42 = vlaneseq
    %v43 = vshrl.u32 %v42, 7
    %v44 = vsub.s32 0, %v43
    %v45 = vrot.slane %v40, %v44
    %vm47 = vcmask 64512
    %v49 = vsel %vm47, %v38, 0
    %51 = vmatprep.subr.mxu0 0.0
    %52 = vmatpush1.msra.mxu0 %v39
    %53 = vmatprep.subr.mxu0 0.0
    %54 = vmatpush1.msra.mxu0 0.0
    %55 = vmatprep.subr.mxu0 0.0
    %56 = vmatpush1.msra.mxu0 0.0
    %57 = vmatprep.subr.mxu0 0.0
    %58 = vmatpush1.msra.mxu0 0.0
    %59 = vmatprep.subr.mxu0 0.0
    %60 = vmatpush1.msra.mxu0 0.0
    %61 = vmatprep.subr.mxu0 0.0
    %62 = vmatpush1.msra.mxu0 0.0
    %63 = vmatprep.subr.mxu0 0.0
    %64 = vmatpush1.msra.mxu0 0.0
    %65 = vmatprep.subr.mxu0 0.0
    %66 = vmatpush1.msra.mxu0 0.0
    %67 = vmatprep.subr.mxu0 0.0
    %68 = vmatpush1.msra.mxu0 0.0
    %69 = vmatprep.subr.mxu0 0.0
    %70 = vmatpush1.msra.mxu0 0.0
    %71 = vmatprep.subr.mxu0 0.0
    %72 = vmatpush1.msra.mxu0 0.0
    %73 = vmatprep.subr.mxu0 0.0
    %74 = vmatpush1.msra.mxu0 0.0
    %75 = vmatprep.subr.mxu0 0.0
    %76 = vmatpush1.msra.mxu0 0.0
    %77 = vmatprep.subr.mxu0 0.0
    %78 = vmatpush1.msra.mxu0 0.0
    %79 = vmatprep.subr.mxu0 0.0
    %80 = vmatpush1.msra.mxu0 0.0
    %81 = vmatprep.subr.mxu0 0.0
    %82 = vmatpush1.msra.mxu0 0.0
    %83 = vmatprep.subr.mxu0 0.0
    %84 = vmatpush1.msra.mxu0 0.0
    %85 = vmatprep.subr.mxu0 0.0
    %86 = vmatpush1.msra.mxu0 0.0
    %87 = vmatprep.subr.mxu0 0.0
    %88 = vmatpush1.msra.mxu0 0.0
    %89 = vmatprep.subr.mxu0 0.0
    %90 = vmatpush1.msra.mxu0 0.0
    %91 = vmatprep.subr.mxu0 0.0
    %92 = vmatpush1.msra.mxu0 0.0
    %93 = vmatprep.subr.mxu0 0.0
    %94 = vmatpush1.msra.mxu0 0.0
    %95 = vmatprep.subr.mxu0 0.0
    %96 = vmatpush1.msra.mxu0 0.0
    %97 = vmatprep.subr.mxu0 0.0
    %98 = vmatpush1.msra.mxu0 0.0
    %99 = vmatprep.subr.mxu0 0.0
    %100 = vmatpush1.msra.mxu0 0.0
    %101 = vmatprep.subr.mxu0 0.0
    %102 = vmatpush1.msra.mxu0 0.0
    %103 = vmatprep.subr.mxu0 0.0
    %104 = vmatpush1.msra.mxu0 0.0
    %105 = vmatprep.subr.mxu0 0.0
    %106 = vmatpush1.msra.mxu0 0.0
    %107 = vmatprep.subr.mxu0 0.0
    %108 = vmatpush1.msra.mxu0 0.0
    %109 = vmatprep.subr.mxu0 0.0
    %110 = vmatpush1.msra.mxu0 0.0
    %111 = vmatprep.subr.mxu0 0.0
    %112 = vmatpush1.msra.mxu0 0.0
    %113 = vmatprep.subr.mxu0 0.0
    %114 = vmatpush1.msra.mxu0 0.0
    %115 = vmatprep.mubr.f32.mxu0 0.0
    %116 = vmatmul.mubr.f32.gmra.mrb[0].mxu0 %v49
    %v117 = vpop.f32.mrb[0].mxu0
    %v118 = vadd.f32 %v45, %v117
    %v119 = vpop.f32.mrb[0].mxu0
    %120 = vdwg.mxu0
    %v121 = vtanh.pop %v118
    %v122 = vld [vmem:[%s3] sm:$0xff]
    %v123 = vld [vmem:[%s3 + $0x8] sm:$0xff]
    %v124 = vld [vmem:[%s3 + $0x10] sm:$0xff]
    %v125 = vld [vmem:[%s3 + $0x18] sm:$0xff]
    %v126 = vld [vmem:[%s3 + $0x20] sm:$0xff]
    %v127 = vld [vmem:[%s3 + $0x28] sm:$0xff]
    %v128 = vld [vmem:[%s3 + $0x30] sm:$0xff]
    %v129 = vld [vmem:[%s3 + $0x38] sm:$0xff]
    %v130 = vld [vmem:[%s3 + $0x40] sm:$0xff]
    %v131 = vld [vmem:[%s3 + $0x48] sm:$0xff]
    %v132 = vld [vmem:[%s3 + $0x50] sm:$0xff]
    %v133 = vld [vmem:[%s3 + $0x58] sm:$0xff]
    %v134 = vld [vmem:[%s3 + $0x60] sm:$0xff]
    %v135 = vld [vmem:[%s3 + $0x68] sm:$0xff]
    %v136 = vld [vmem:[%s3 + $0x70] sm:$0xff]
    %v137 = vld [vmem:[%s3 + $0x78] sm:$0xff]
    %v138 = vld [vmem:[%s4] sm:$0x1]
    %v140 = vlaneseq
    %v141 = vshrl.u32 %v140, 7
    %v142 = vsub.s32 0, %v141
    %v143 = vrot.slane %v138, %v142
    %145 = vmatprep.subr.mxu0 0.0
    %146 = vmatpush1.msra.mxu0 %v122
    %147 = vmatprep.subr.mxu0 0.0
    %148 = vmatpush1.msra.mxu0 %v123
    %149 = vmatprep.subr.mxu0 0.0
    %150 = vmatpush1.msra.mxu0 %v124
    %151 = vmatprep.subr.mxu0 0.0
    %152 = vmatpush1.msra.mxu0 %v125
    %153 = vmatprep.subr.mxu0 0.0
    %154 = vmatpush1.msra.mxu0 %v126
    %155 = vmatprep.subr.mxu0 0.0
    %156 = vmatpush1.msra.mxu0 %v127
    %157 = vmatprep.subr.mxu0 0.0
    %158 = vmatpush1.msra.mxu0 %v128
    %159 = vmatprep.subr.mxu0 0.0
    %160 = vmatpush1.msra.mxu0 %v129
    %161 = vmatprep.subr.mxu0 0.0
    %162 = vmatpush1.msra.mxu0 %v130
    %163 = vmatprep.subr.mxu0 0.0
    %164 = vmatpush1.msra.mxu0 %v131
    %165 = vmatprep.subr.mxu0 0.0
    %166 = vmatpush1.msra.mxu0 %v132
    %167 = vmatprep.subr.mxu0 0.0
    %168 = vmatpush1.msra.mxu0 %v133
    %169 = vmatprep.subr.mxu0 0.0
    %170 = vmatpush1.msra.mxu0 %v134
    %171 = vmatprep.subr.mxu0 0.0
    %172 = vmatpush1.msra.mxu0 %v135
    %173 = vmatprep.subr.mxu0 0.0
    %174 = vmatpush1.msra.mxu0 %v136
    %175 = vmatprep.subr.mxu0 0.0
    %176 = vmatpush1.msra.mxu0 %v137
    %177 = vmatprep.subr.mxu0 0.0
    %178 = vmatpush1.msra.mxu0 0.0
    %179 = vmatprep.subr.mxu0 0.0
    %180 = vmatpush1.msra.mxu0 0.0
    %181 = vmatprep.subr.mxu0 0.0
    %182 = vmatpush1.msra.mxu0 0.0
    %183 = vmatprep.subr.mxu0 0.0
    %184 = vmatpush1.msra.mxu0 0.0
    %185 = vmatprep.subr.mxu0 0.0
    %186 = vmatpush1.msra.mxu0 0.0
    %187 = vmatprep.subr.mxu0 0.0
    %188 = vmatpush1.msra.mxu0 0.0
    %189 = vmatprep.subr.mxu0 0.0
    %190 = vmatpush1.msra.mxu0 0.0
    %191 = vmatprep.subr.mxu0 0.0
    %192 = vmatpush1.msra.mxu0 0.0
    %193 = vmatprep.subr.mxu0 0.0
    %194 = vmatpush1.msra.mxu0 0.0
    %195 = vmatprep.subr.mxu0 0.0
    %196 = vmatpush1.msra.mxu0 0.0
    %197 = vmatprep.subr.mxu0 0.0
    %198 = vmatpush1.msra.mxu0 0.0
    %199 = vmatprep.subr.mxu0 0.0
    %200 = vmatpush1.msra.mxu0 0.0
    %201 = vmatprep.subr.mxu0 0.0
    %202 = vmatpush1.msra.mxu0 0.0
    %203 = vmatprep.subr.mxu0 0.0
    %204 = vmatpush1.msra.mxu0 0.0
    %205 = vmatprep.subr.mxu0 0.0
    %206 = vmatpush1.msra.mxu0 0.0
    %207 = vmatprep.subr.mxu0 0.0
    %208 = vmatpush1.msra.mxu0 0.0
    %209 = vmatprep.mubr.f32.mxu0 0.0
    %210 = vmatmul.mubr.f32.gmra.mrb[0].mxu0 %v121
    %v211 = vpop.f32.mrb[0].mxu0
    %v212 = vadd.f32 %v143, %v211
    %v213 = vpop.f32.mrb[0].mxu0
    %214 = vdwg.mxu0
    %v215 = vtanh.pop %v212
    %v216 = vld [vmem:[%s5] sm:$0xff]
    %v217 = vld [vmem:[%s5 + $0x8] sm:$0xff]
    %v218 = vld [vmem:[%s5 + $0x10] sm:$0xff]
    %v219 = vld [vmem:[%s5 + $0x18] sm:$0xff]
    %v220 = vld [vmem:[%s5 + $0x20] sm:$0xff]
    %v221 = vld [vmem:[%s5 + $0x28] sm:$0xff]
    %v222 = vld [vmem:[%s5 + $0x30] sm:$0xff]
    %v223 = vld [vmem:[%s5 + $0x38] sm:$0xff]
    %v224 = vld [vmem:[%s5 + $0x40] sm:$0xff]
    %v225 = vld [vmem:[%s5 + $0x48] sm:$0xff]
    %v226 = vld [vmem:[%s5 + $0x50] sm:$0xff]
    %v227 = vld [vmem:[%s5 + $0x58] sm:$0xff]
    %v228 = vld [vmem:[%s5 + $0x60] sm:$0xff]
    %v229 = vld [vmem:[%s5 + $0x68] sm:$0xff]
    %v230 = vld [vmem:[%s5 + $0x70] sm:$0xff]
    %v231 = vld [vmem:[%s5 + $0x78] sm:$0xff]
    %v232 = vld [vmem:[%s6] sm:$0x1]
    %v234 = vlaneseq
    %v235 = vshrl.u32 %v234, 7
    %v236 = vsub.s32 0, %v235
    %v237 = vrot.slane %v232, %v236
    %239 = vmatprep.subr.mxu0 0.0
    %240 = vmatpush1.msra.mxu0 %v216
    %241 = vmatprep.subr.mxu0 0.0
    %242 = vmatpush1.msra.mxu0 %v217
    %243 = vmatprep.subr.mxu0 0.0
    %244 = vmatpush1.msra.mxu0 %v218
    %245 = vmatprep.subr.mxu0 0.0
    %246 = vmatpush1.msra.mxu0 %v219
    %247 = vmatprep.subr.mxu0 0.0
    %248 = vmatpush1.msra.mxu0 %v220
    %249 = vmatprep.subr.mxu0 0.0
    %250 = vmatpush1.msra.mxu0 %v221
    %251 = vmatprep.subr.mxu0 0.0
    %252 = vmatpush1.msra.mxu0 %v222
    %253 = vmatprep.subr.mxu0 0.0
    %254 = vmatpush1.msra.mxu0 %v223
    %255 = vmatprep.subr.mxu0 0.0
    %256 = vmatpush1.msra.mxu0 %v224
    %257 = vmatprep.subr.mxu0 0.0
    %258 = vmatpush1.msra.mxu0 %v225
    %259 = vmatprep.subr.mxu0 0.0
    %260 = vmatpush1.msra.mxu0 %v226
    %261 = vmatprep.subr.mxu0 0.0
    %262 = vmatpush1.msra.mxu0 %v227
    %263 = vmatprep.subr.mxu0 0.0
    %264 = vmatpush1.msra.mxu0 %v228
    %265 = vmatprep.subr.mxu0 0.0
    %266 = vmatpush1.msra.mxu0 %v229
    %267 = vmatprep.subr.mxu0 0.0
    %268 = vmatpush1.msra.mxu0 %v230
    %269 = vmatprep.subr.mxu0 0.0
    %270 = vmatpush1.msra.mxu0 %v231
    %271 = vmatprep.subr.mxu0 0.0
    %272 = vmatpush1.msra.mxu0 0.0
    %273 = vmatprep.subr.mxu0 0.0
    %274 = vmatpush1.msra.mxu0 0.0
    %275 = vmatprep.subr.mxu0 0.0
    %276 = vmatpush1.msra.mxu0 0.0
    %277 = vmatprep.subr.mxu0 0.0
    %278 = vmatpush1.msra.mxu0 0.0
    %279 = vmatprep.subr.mxu0 0.0
    %280 = vmatpush1.msra.mxu0 0.0
    %281 = vmatprep.subr.mxu0 0.0
    %282 = vmatpush1.msra.mxu0 0.0
    %283 = vmatprep.subr.mxu0 0.0
    %284 = vmatpush1.msra.mxu0 0.0
    %285 = vmatprep.subr.mxu0 0.0
    %286 = vmatpush1.msra.mxu0 0.0
    %287 = vmatprep.subr.mxu0 0.0
    %288 = vmatpush1.msra.mxu0 0.0
    %289 = vmatprep.subr.mxu0 0.0
    %290 = vmatpush1.msra.mxu0 0.0
    %291 = vmatprep.subr.mxu0 0.0
    %292 = vmatpush1.msra.mxu0 0.0
    %293 = vmatprep.subr.mxu0 0.0
    %294 = vmatpush1.msra.mxu0 0.0
    %295 = vmatprep.subr.mxu0 0.0
    %296 = vmatpush1.msra.mxu0 0.0
    %297 = vmatprep.subr.mxu0 0.0
    %298 = vmatpush1.msra.mxu0 0.0
    %299 = vmatprep.subr.mxu0 0.0
    %300 = vmatpush1.msra.mxu0 0.0
    %301 = vmatprep.subr.mxu0 0.0
    %302 = vmatpush1.msra.mxu0 0.0
    %303 = vmatprep.mubr.f32.mxu0 0.0
    %304 = vmatmul.mubr.f32.gmra.mrb[0].mxu0 %v215
    %v305 = vpop.f32.mrb[0].mxu0
    %v306 = vadd.f32 %v237, %v305
    %v307 = vpop.f32.mrb[0].mxu0
    %308 = vdwg.mxu0
    %vm309 = vcmask 15360
    %310 = vst.msk [vmem:[%s7] sm:$0xff] %vm309, %v306
    // Predicated region
    $region34: #{tpu_custom_call.1} parent=1 // pred_check
      _
    $region35: #{tpu_custom_call.1} parent=1 // pred_check_branch
      %312 = sbr.rel (0) target = $region37
    $region36: #{tpu_custom_call.1} parent=1 // pred_region
      _
    $region37: #{tpu_custom_call.1} parent=1 // pred_fallthru
      _
    // Predicated region
    $region38: #{tpu_custom_call.1} parent=1 // pred_check
      _
    $region39: #{tpu_custom_call.1} parent=1 // pred_check_branch
      %314 = sbr.rel (0) target = $region41
    $region40: #{tpu_custom_call.1} parent=1 // pred_region
      _
    $region41: #{tpu_custom_call.1} parent=1 // pred_fallthru
      _
    %315 = vsyncpa [#allocation3], 1

</llo_original>
